<compile_context>
chip_gen: v5e
topology: v5e:2x2
jax: 0.10.0
libtpu: 0.0.40
codegen_flags: <defaults>
</compile_context>

<pallas_src>
import functools

import numpy as np
import jax
import jax.numpy as jnp
from jax.experimental import pallas as pl
from jax.experimental.pallas import tpu as pltpu


def _upscale_kernel(w_ref, x_ref, b_ref, o_ref, *, W, Cout, compute_dtype):
    """One batch element per grid step.

    w_ref: (9*Cout, Cin)     tap-major weight (tap t = kh*3 + kw), compute_dtype
    x_ref: (1, Cin, HWe)     flattened image, zero-padded by W+1 pixels
    b_ref: (Cout, 1)         f32 bias
    o_ref: (4, 1, Cout, HW)  f32 phase outputs, 0=ee 1=eo 2=oe 3=oo where
                             y[2m+pr, 2l+pc] = phase[2*pr+pc][:, m*W + l]
    """
    HW = o_ref.shape[-1]

    x = x_ref[0].astype(compute_dtype)                      # (Cin, HWe)
    # single wide MXU matmul: every tap for every pixel, f32 accumulation
    z = jnp.dot(w_ref[...], x,
                preferred_element_type=jnp.float32)         # (9*Cout, HWe)

    def tap(kh, kw, shift=0):
        # contribution of weight tap (kh, kw) taken at pixel p + shift.
        # (the out-of-range / padded tail only feeds output rows/cols that are
        #  sliced off in the wrapper, so no masking is needed)
        t = kh * 3 + kw
        return z[t * Cout:(t + 1) * Cout, shift:shift + HW]  # (Cout, HW)

    # in-VMEM col2im: only the taps that are non-zero for each output parity
    ee = tap(1, 1)
    eo = tap(1, 2) + tap(1, 0, 1)
    oe = tap(2, 1) + tap(0, 1, W)
    oo = tap(2, 2) + tap(2, 0, 1) + tap(0, 2, W) + tap(0, 0, W + 1)

    b = b_ref[...]                                           # (Cout, 1) f32
    o_ref[0, 0] = ee + b
    o_ref[1, 0] = eo + b
    o_ref[2, 0] = oe + b
    o_ref[3, 0] = oo + b


def upscale_conv_transpose2d(x, weight, bias, *, compute_dtype=jnp.bfloat16):
    """Forward of nn.ConvTranspose2d(Cin, Cout, kernel_size=3, stride=2, padding=1).

    x:      (N, Cin, H, W)     NCHW (PyTorch layout)
    weight: (Cin, Cout, 3, 3)  PyTorch ConvTranspose2d weight layout
    bias:   (Cout,)
    returns (N, Cout, 2H-1, 2W-1) NCHW
    """
    N, Cin, H, W = x.shape
    wCin, Cout, KH, KW = weight.shape
    assert (KH, KW) == (3, 3) and wCin == Cin
    Hout, Wout = 2 * H - 1, 2 * W - 1
    HW = H * W
    HWe = HW + W + 1            # room for the +1 / +W / +W+1 neighbour shifts

    # --- tiny XLA-side glue (input-sized only, no 9x duplication) -----------
    x_flat = jnp.pad(x.reshape(N, Cin, HW), ((0, 0), (0, 0), (0, W + 1)))
    # tap-major weight: rows [t*Cout:(t+1)*Cout] = weight[:, :, kh, kw].T
    w_cat = jnp.transpose(weight, (2, 3, 1, 0)).reshape(9 * Cout, Cin)
    w_cat = w_cat.astype(compute_dtype)
    bias2d = bias.reshape(Cout, 1).astype(jnp.float32)

    kernel = functools.partial(
        _upscale_kernel, W=W, Cout=Cout, compute_dtype=compute_dtype)

    # one grid step per batch element (>=2 steps keeps both v7x TCs busy);
    # weight & bias blocks are constant -> stay resident in VMEM.
    # TODO(synk): for very large H*W or channel counts add a spatial/channel
    # grid axis (needs a halo row); MGRL-sized feature maps fit VMEM easily.
    out = pl.pallas_call(
        kernel,
        out_shape=jax.ShapeDtypeStruct((4, N, Cout, HW), jnp.float32),
        grid_spec=pltpu.PrefetchScalarGridSpec(
            num_scalar_prefetch=0,
            grid=(N,),
            in_specs=[
                pl.BlockSpec((9 * Cout, Cin), lambda n: (0, 0)),   # weights
                pl.BlockSpec((1, Cin, HWe), lambda n: (n, 0, 0)),  # image n
                pl.BlockSpec((Cout, 1), lambda n: (0, 0)),         # bias
            ],
            out_specs=pl.BlockSpec((4, 1, Cout, HW), lambda n: (0, n, 0, 0)),
        ),
        compiler_params=pltpu.CompilerParams(
            dimension_semantics=("parallel",)),
    )(w_cat, x_flat, bias2d)

    # --- sub-pixel interleave of the 4 phases into strided NCHW -------------
    # TODO(synk): strided (every-other-column) HBM writes are not expressible
    # via BlockSpec, so this one output-sized transpose remains in XLA.
    y = out.reshape(2, 2, N, Cout, H, W)          # (pr, pc, n, c, m, l)
    y = y.transpose(2, 3, 4, 0, 5, 1)             # (n, c, m, pr, l, pc)
    y = y.reshape(N, Cout, 2 * H, 2 * W)[:, :, :Hout, :Wout]
    return y.astype(x.dtype)


def _reference_conv_transpose2d(x, w, bias, stride=2, padding=1):
    """Independent numpy reference via the scatter definition of ConvTranspose2d."""
    N, Cin, H, W = x.shape
    _, Cout, K, _ = w.shape
    Hout = (H - 1) * stride - 2 * padding + K
    Wout = (W - 1) * stride - 2 * padding + K
    y = np.zeros((N, Cout, Hout + 2 * padding, Wout + 2 * padding), dtype=np.float64)
    for kh in range(K):
        for kw in range(K):
            contrib = np.einsum('nchw,co->nohw', x, w[:, :, kh, kw])
            y[:, :,
              kh:kh + (H - 1) * stride + 1:stride,
              kw:kw + (W - 1) * stride + 1:stride] += contrib
    y = y[:, :, padding:padding + Hout, padding:padding + Wout]
    return y + bias.reshape(1, -1, 1, 1)


if __name__ == "__main__":
    N, Cin, Cout, H, W = 2, 4, 8, 16, 16
    key = jax.random.PRNGKey(0)
    kx, kw_key, kb_key = jax.random.split(key, 3)

    # Deterministic parameter init (PyTorch-style uniform bounds).
    fan_in = Cout * 3 * 3
    bound = 1.0 / np.sqrt(fan_in)
    weight = jax.random.uniform(kw_key, (Cin, Cout, 3, 3), jnp.float32, -bound, bound)
    bias = jax.random.uniform(kb_key, (Cout,), jnp.float32, -bound, bound)
    x = jax.random.normal(kx, (N, Cin, H, W), jnp.float32)

    fwd = jax.jit(upscale_conv_transpose2d, static_argnames=("compute_dtype",))

    y_ref = _reference_conv_transpose2d(
        np.asarray(x, np.float64), np.asarray(weight, np.float64),
        np.asarray(bias, np.float64))

    # exactness check with f32 MXU operands
    y_f32 = jax.block_until_ready(fwd(x, weight, bias, compute_dtype=jnp.float32))
    assert y_f32.shape == (N, Cout, 2 * H - 1, 2 * W - 1), y_f32.shape
    np.testing.assert_allclose(np.asarray(y_f32), y_ref, rtol=1e-4, atol=1e-4)

    # production path: bf16 MXU operands, f32 accumulation
    y_bf16 = jax.block_until_ready(fwd(x, weight, bias))
    assert y_bf16.shape == (N, Cout, 2 * H - 1, 2 * W - 1), y_bf16.shape
    np.testing.assert_allclose(np.asarray(y_bf16), y_ref, rtol=5e-2, atol=5e-2)

    print("KERNEL_OK")
</pallas_src>

<mosaic_0001>
module attributes {stable_mosaic.version = 11 : i64} {
  func.func @_upscale_kernel(%arg0: i32, %arg1: memref<72x4xf32, #tpu.memory_space<vmem>>, %arg2: memref<1x4x273xf32, #tpu.memory_space<vmem>>, %arg3: memref<8x1xf32, #tpu.memory_space<vmem>>, %arg4: memref<4x1x8x256xf32, #tpu.memory_space<vmem>>) attributes {dimension_semantics = [#tpu.dimension_semantics<parallel>], iteration_bounds = array<i64: 2>, scalar_prefetch = 0 : i64, scratch_operands = 0 : i64, tpu.core_type = #tpu.core_type<tc>, window_params = [{pipeline_mode = #tpu.pipeline_mode<synchronous>, transform_indices = @transform_0, window_bounds = array<i64: 72, 4>}, {transform_indices = @transform_1, window_bounds = array<i64: 1, 4, 273>}, {pipeline_mode = #tpu.pipeline_mode<synchronous>, transform_indices = @transform_2, window_bounds = array<i64: 8, 1>}, {transform_indices = @transform_3, window_bounds = array<i64: 4, 1, 8, 256>}]} {
    %c0 = arith.constant 0 : index
    %c0_0 = arith.constant 0 : index
    %c0_1 = arith.constant 0 : index
    %0 = vector.load %arg2[%c0, %c0_0, %c0_1] : memref<1x4x273xf32, #tpu.memory_space<vmem>>, vector<1x4x273xf32>
    %1 = vector.shape_cast %0 : vector<1x4x273xf32> to vector<4x273xf32>
    %c0_2 = arith.constant 0 : index
    %c0_3 = arith.constant 0 : index
    %2 = vector.load %arg1[%c0_2, %c0_3] : memref<72x4xf32, #tpu.memory_space<vmem>>, vector<72x4xf32>
    %cst = arith.constant dense<0.000000e+00> : vector<72x273xf32>
    %3 = tpu.matmul %2, %1, %cst {dimension_numbers = #tpu.dot_dimension_numbers<[1], [0], [0], [1], [0, 0, 1, 1], [], []>} : vector<72x4xf32>, vector<4x273xf32>, vector<72x273xf32> -> vector<72x273xf32>
    %4 = vector.extract_strided_slice %3 {offsets = [32, 0], sizes = [8, 256], strides = [1, 1]} : vector<72x273xf32> to vector<8x256xf32>
    %5 = vector.extract_strided_slice %3 {offsets = [40, 0], sizes = [8, 256], strides = [1, 1]} : vector<72x273xf32> to vector<8x256xf32>
    %6 = vector.extract_strided_slice %3 {offsets = [24, 1], sizes = [8, 256], strides = [1, 1]} : vector<72x273xf32> to vector<8x256xf32>
    %7 = arith.addf %5, %6 : vector<8x256xf32>
    %8 = vector.extract_strided_slice %3 {offsets = [56, 0], sizes = [8, 256], strides = [1, 1]} : vector<72x273xf32> to vector<8x256xf32>
    %9 = vector.extract_strided_slice %3 {offsets = [8, 16], sizes = [8, 256], strides = [1, 1]} : vector<72x273xf32> to vector<8x256xf32>
    %10 = arith.addf %8, %9 : vector<8x256xf32>
    %11 = vector.extract_strided_slice %3 {offsets = [64, 0], sizes = [8, 256], strides = [1, 1]} : vector<72x273xf32> to vector<8x256xf32>
    %12 = vector.extract_strided_slice %3 {offsets = [48, 1], sizes = [8, 256], strides = [1, 1]} : vector<72x273xf32> to vector<8x256xf32>
    %13 = arith.addf %11, %12 : vector<8x256xf32>
    %14 = vector.extract_strided_slice %3 {offsets = [16, 16], sizes = [8, 256], strides = [1, 1]} : vector<72x273xf32> to vector<8x256xf32>
    %15 = arith.addf %13, %14 : vector<8x256xf32>
    %16 = vector.extract_strided_slice %3 {offsets = [0, 17], sizes = [8, 256], strides = [1, 1]} : vector<72x273xf32> to vector<8x256xf32>
    %17 = arith.addf %15, %16 : vector<8x256xf32>
    %c0_4 = arith.constant 0 : index
    %c0_5 = arith.constant 0 : index
    %18 = vector.load %arg3[%c0_4, %c0_5] : memref<8x1xf32, #tpu.memory_space<vmem>>, vector<8x1xf32>
    %19 = vector.broadcast %18 : vector<8x1xf32> to vector<8x256xf32>
    %20 = arith.addf %4, %19 : vector<8x256xf32>
    %c0_6 = arith.constant 0 : index
    %c0_7 = arith.constant 0 : index
    %c0_8 = arith.constant 0 : index
    %c0_9 = arith.constant 0 : index
    %21 = vector.load %arg4[%c0_6, %c0_7, %c0_8, %c0_9] : memref<4x1x8x256xf32, #tpu.memory_space<vmem>>, vector<1x1x8x256xf32>
    %22 = vector.shape_cast %21 : vector<1x1x8x256xf32> to vector<8x256xf32>
    %23 = vector.shape_cast %20 : vector<8x256xf32> to vector<1x1x8x256xf32>
    tpu.vector_store %arg4[%c0_6, %c0_7, %c0_8, %c0_9], %23 {strides = array<i32>} : memref<4x1x8x256xf32, #tpu.memory_space<vmem>>, vector<1x1x8x256xf32>,
    %24 = vector.broadcast %18 : vector<8x1xf32> to vector<8x256xf32>
    %25 = arith.addf %7, %24 : vector<8x256xf32>
    %c1 = arith.constant 1 : index
    %c0_10 = arith.constant 0 : index
    %c0_11 = arith.constant 0 : index
    %c0_12 = arith.constant 0 : index
    %26 = vector.load %arg4[%c1, %c0_10, %c0_11, %c0_12] : memref<4x1x8x256xf32, #tpu.memory_space<vmem>>, vector<1x1x8x256xf32>
    %27 = vector.shape_cast %26 : vector<1x1x8x256xf32> to vector<8x256xf32>
    %28 = vector.shape_cast %25 : vector<8x256xf32> to vector<1x1x8x256xf32>
    tpu.vector_store %arg4[%c1, %c0_10, %c0_11, %c0_12], %28 {strides = array<i32>} : memref<4x1x8x256xf32, #tpu.memory_space<vmem>>, vector<1x1x8x256xf32>,
    %29 = vector.broadcast %18 : vector<8x1xf32> to vector<8x256xf32>
    %30 = arith.addf %10, %29 : vector<8x256xf32>
    %c2 = arith.constant 2 : index
    %c0_13 = arith.constant 0 : index
    %c0_14 = arith.constant 0 : index
    %c0_15 = arith.constant 0 : index
    %31 = vector.load %arg4[%c2, %c0_13, %c0_14, %c0_15] : memref<4x1x8x256xf32, #tpu.memory_space<vmem>>, vector<1x1x8x256xf32>
    %32 = vector.shape_cast %31 : vector<1x1x8x256xf32> to vector<8x256xf32>
    %33 = vector.shape_cast %30 : vector<8x256xf32> to vector<1x1x8x256xf32>
    tpu.vector_store %arg4[%c2, %c0_13, %c0_14, %c0_15], %33 {strides = array<i32>} : memref<4x1x8x256xf32, #tpu.memory_space<vmem>>, vector<1x1x8x256xf32>,
    %34 = vector.broadcast %18 : vector<8x1xf32> to vector<8x256xf32>
    %35 = arith.addf %17, %34 : vector<8x256xf32>
    %c3 = arith.constant 3 : index
    %c0_16 = arith.constant 0 : index
    %c0_17 = arith.constant 0 : index
    %c0_18 = arith.constant 0 : index
    %36 = vector.load %arg4[%c3, %c0_16, %c0_17, %c0_18] : memref<4x1x8x256xf32, #tpu.memory_space<vmem>>, vector<1x1x8x256xf32>
    %37 = vector.shape_cast %36 : vector<1x1x8x256xf32> to vector<8x256xf32>
    %38 = vector.shape_cast %35 : vector<8x256xf32> to vector<1x1x8x256xf32>
    tpu.vector_store %arg4[%c3, %c0_16, %c0_17, %c0_18], %38 {strides = array<i32>} : memref<4x1x8x256xf32, #tpu.memory_space<vmem>>, vector<1x1x8x256xf32>,
    return
  }
  func.func @transform_0(%arg0: i32) -> (i32, i32) {
    %c0_i32 = arith.constant 0 : i32
    %c0_i32_0 = arith.constant 0 : i32
    %c0_i32_1 = arith.constant 0 : i32
    return %c0_i32, %c0_i32_0 : i32, i32
  }
  func.func @transform_1(%arg0: i32) -> (i32, i32, i32) {
    %c0_i32 = arith.constant 0 : i32
    %c0_i32_0 = arith.constant 0 : i32
    %c0_i32_1 = arith.constant 0 : i32
    return %arg0, %c0_i32, %c0_i32_0 : i32, i32, i32
  }
  func.func @transform_2(%arg0: i32) -> (i32, i32) {
    %c0_i32 = arith.constant 0 : i32
    %c0_i32_0 = arith.constant 0 : i32
    %c0_i32_1 = arith.constant 0 : i32
    return %c0_i32, %c0_i32_0 : i32, i32
  }
  func.func @transform_3(%arg0: i32) -> (i32, i32, i32, i32) {
    %c0_i32 = arith.constant 0 : i32
    %c0_i32_0 = arith.constant 0 : i32
    %c0_i32_1 = arith.constant 0 : i32
    %c0_i32_2 = arith.constant 0 : i32
    return %c0_i32, %arg0, %c0_i32_0, %c0_i32_1 : i32, i32, i32, i32
  }
}

</mosaic_0001>

<llo_original>
// kernel: upscale_conv_transpose2d.1
$region0: #{upscale_conv_transpose2d.1}
  #allocation0 [shape = 'u32[]', space=smem, size = 0x4, offset = 0x4, fixed_abs, tag = 'smem constant byte address 0x4 - core index']
  #allocation1 [shape = 'u32[72,128]{1,0:T(1,128)}', space=vmem, size = 0x9000, scoped, tag = 'internal scratch']
  %s0 = inlined_call_operand.vmem [shape: f32[72,4], index: 0, kind: input, shape index: {}]
  %s1 = inlined_call_operand.vmem [shape: f32[2,4,273], index: 1, kind: input, shape index: {}]
  %s2 = inlined_call_operand.vmem [shape: f32[8,1], index: 2, kind: input, shape index: {}]
  %s3 = inlined_call_operand.vmem [shape: f32[4,2,8,256], index: 3, kind: output, shape index: {}]
  %s4 = sld [smem:[#allocation0]]
  $region64: #{upscale_conv_transpose2d.1} parent=0
    _
  %s6 = ssub.s32 1, %s4
  %s7 = scalar_select 0, %s6, %s4
  $region1: #{upscale_conv_transpose2d.1} parent=0
    #allocation2 [shape = 'u8[65536]{0}', space=vmem, size = 0x10000, scoped, tag = 'output window, operand 0']
    loop: start=0, step=1, limit=4
    $region2: #{upscale_conv_transpose2d.1} parent=1 // loop_pre_header
      _
    $region3: #{upscale_conv_transpose2d.1} parent=1 // loop_header
      %s9 = sphi 0, %s13
      %p10 = scmp.ge.s32.totalorder %s9, 4
      %s17 = sphi 0, %s17
      %s19 = sphi 0, %s17
      %s20 = sphi 0, %s19
      %s34 = sphi 0, %s20
      %s40 = sphi 0, %s42
      %s43 = sphi 0, %s40
      %s44 = sphi 0, %s43
      %s60 = sphi 0, %s44
      %s64 = sphi 0, %s64
      %s66 = sphi 0, %s64
      %s67 = sphi 0, %s66
      %s81 = sphi 0, %s67
      %s87 = sphi 0, %s89
      %s90 = sphi 0, %s87
      %s91 = sphi 0, %s90
      %s107 = sphi 0, %s91
    $region4: #{upscale_conv_transpose2d.1} parent=1 // loop_header_branch
      %12 = sbr.rel (%p10) target = $region8
    $region5: #{upscale_conv_transpose2d.1} parent=1 // loop_body
      %s14 = ssub.s32 %s9, 1
      %s15 = ssub.s32 %s9, 2
      %s16 = sadd.s32 %s9, 1
      %s18 = sadd.s32 %s17, 1
      %p21 = scmp.eq.s32.totalorder %s9, 1
      %p22 = scmp.ne.s32.totalorder %s17, %s19
      %p23 = scmp.eq.s32.totalorder %s9, 0
      %p24 = por %p22, %p23
      %p25 = scmp.ne.s32.totalorder %s17, %s19
      %p26 = scmp.eq.s32.totalorder %s14, 1
      %p27 = por %p25, %p26
      %p28 = scmp.ne.s32.totalorder %s19, %s20
      %p29 = scmp.eq.s32.totalorder %s14, 0
      %p30 = por %p28, %p29
      %p31 = scmp.ne.s32.totalorder %s19, %s20
      %p32 = scmp.eq.s32.totalorder %s15, 1
      %p33 = por %p31, %p32
      %p35 = scmp.ne.s32.totalorder %s20, %s34
      %p36 = scmp.eq.s32.totalorder %s15, 0
      %p37 = por %p35, %p36
      %s38 = ssub.s32 %s9, %s16
      %p39 = scmp.eq.s32.totalorder %s38, 0
      %s41 = sadd.s32 %s40, 1
      %s42 = scalar_select %p39, %s40, %s41
      %p45 = pneg %p39
      %p46 = scmp.eq.s32.totalorder %s9, 1
      %p47 = por %p45, %p46
      %p48 = scmp.ne.s32.totalorder %s40, %s43
      %p49 = scmp.eq.s32.totalorder %s9, 0
      %p50 = por %p48, %p49
      %p51 = scmp.ne.s32.totalorder %s40, %s43
      %p52 = scmp.eq.s32.totalorder %s14, 1
      %p53 = por %p51, %p52
      %p54 = scmp.ne.s32.totalorder %s43, %s44
      %p55 = scmp.eq.s32.totalorder %s14, 0
      %p56 = por %p54, %p55
      %p57 = scmp.ne.s32.totalorder %s43, %s44
      %p58 = scmp.eq.s32.totalorder %s15, 1
      %p59 = por %p57, %p58
      %p61 = scmp.ne.s32.totalorder %s44, %s60
      %p62 = scmp.eq.s32.totalorder %s15, 0
      %p63 = por %p61, %p62
      %s65 = sadd.s32 %s64, 1
      %p68 = scmp.eq.s32.totalorder %s9, 1
      %p69 = scmp.ne.s32.totalorder %s64, %s66
      %p70 = scmp.eq.s32.totalorder %s9, 0
      %p71 = por %p69, %p70
      %p72 = scmp.ne.s32.totalorder %s64, %s66
      %p73 = scmp.eq.s32.totalorder %s14, 1
      %p74 = por %p72, %p73
      %p75 = scmp.ne.s32.totalorder %s66, %s67
      %p76 = scmp.eq.s32.totalorder %s14, 0
      %p77 = por %p75, %p76
      %p78 = scmp.ne.s32.totalorder %s66, %s67
      %p79 = scmp.eq.s32.totalorder %s15, 1
      %p80 = por %p78, %p79
      %p82 = scmp.ne.s32.totalorder %s67, %s81
      %p83 = scmp.eq.s32.totalorder %s15, 0
      %p84 = por %p82, %p83
      %s85 = ssub.s32 %s9, %s16
      %p86 = scmp.eq.s32.totalorder %s85, 0
      %s88 = sadd.s32 %s87, 1
      %s89 = scalar_select %p86, %s87, %s88
      %p92 = pneg %p86
      %p93 = scmp.eq.s32.totalorder %s9, 1
      %p94 = por %p92, %p93
      %p95 = scmp.ne.s32.totalorder %s87, %s90
      %p96 = scmp.eq.s32.totalorder %s9, 0
      %p97 = por %p95, %p96
      %p98 = scmp.ne.s32.totalorder %s87, %s90
      %p99 = scmp.eq.s32.totalorder %s14, 1
      %p100 = por %p98, %p99
      %p101 = scmp.ne.s32.totalorder %s90, %s91
      %p102 = scmp.eq.s32.totalorder %s14, 0
      %p103 = por %p101, %p102
      %p104 = scmp.ne.s32.totalorder %s90, %s91
      %p105 = scmp.eq.s32.totalorder %s15, 1
      %p106 = por %p104, %p105
      %p108 = scmp.ne.s32.totalorder %s91, %s107
      %p109 = scmp.eq.s32.totalorder %s15, 0
      %p110 = por %p108, %p109
      %p111 = scmp.le.s32.totalorder 1, %s9
      %p112 = scmp.lt.s32.totalorder %s9, 3
      %p113 = pnand %p111, %p112
      %p114 = pneg %p113
      // Predicated region
      $region9: #{upscale_conv_transpose2d.1} parent=5 // pred_check
        _
      $region10: #{upscale_conv_transpose2d.1} parent=5 // pred_check_branch
        %116 = sbr.rel (%p113) target = $region12
      $region11: #{upscale_conv_transpose2d.1} parent=5 // pred_region
        %s117 = ssub.s32 %s9, 1
        // Predicated region
        $region13: #{upscale_conv_transpose2d.1} parent=11 // pred_check
          %p118 = pneg %p30
        $region14: #{upscale_conv_transpose2d.1} parent=11 // pred_check_branch
          %120 = sbr.rel (%p118) target = $region16
        $region15: #{upscale_conv_transpose2d.1} parent=11 // pred_region
          _
        $region16: #{upscale_conv_transpose2d.1} parent=11 // pred_fallthru
          _
        // Predicated region
        $region17: #{upscale_conv_transpose2d.1} parent=11 // pred_check
          %p121 = pneg %p77
        $region18: #{upscale_conv_transpose2d.1} parent=11 // pred_check_branch
          %123 = sbr.rel (%p121) target = $region20
        $region19: #{upscale_conv_transpose2d.1} parent=11 // pred_region
          _
        $region20: #{upscale_conv_transpose2d.1} parent=11 // pred_fallthru
          _
      $region12: #{upscale_conv_transpose2d.1} parent=5 // pred_fallthru
        _
      %p124 = scmp.lt.s32.totalorder %s9, 2
      // Predicated region
      $region21: #{upscale_conv_transpose2d.1} parent=5 // pred_check
        %p125 = pneg %p124
      $region22: #{upscale_conv_transpose2d.1} parent=5 // pred_check_branch
        %127 = sbr.rel (%p125) target = $region24
      $region23: #{upscale_conv_transpose2d.1} parent=5 // pred_region
        // Predicated region
        $region25: #{upscale_conv_transpose2d.1} parent=23 // pred_check
          %p128 = pneg %p50
        $region26: #{upscale_conv_transpose2d.1} parent=23 // pred_check_branch
          %130 = sbr.rel (%p128) target = $region28
        $region27: #{upscale_conv_transpose2d.1} parent=23 // pred_region
          %p131 = scmp.lt.s32.totalorder %s9, 1
          %s132 = scalar_select %p131, %s9, 1
          %s133 = smul.addr %s132, 3
          %s134 = smul.addr %s133, 4
          %s135 = scalar_lea.vmem %s1, %s134
        $region28: #{upscale_conv_transpose2d.1} parent=23 // pred_fallthru
          _
      $region24: #{upscale_conv_transpose2d.1} parent=5 // pred_fallthru
        _
      %p136 = scmp.le.s32.totalorder 1, %s9
      %p137 = scmp.lt.s32.totalorder %s9, 3
      %p138 = pnand %p136, %p137
      %p139 = pneg %p138
      // Predicated region
      $region29: #{upscale_conv_transpose2d.1} parent=5 // pred_check
        _
      $region30: #{upscale_conv_transpose2d.1} parent=5 // pred_check_branch
        %141 = sbr.rel (%p138) target = $region32
      $region31: #{upscale_conv_transpose2d.1} parent=5 // pred_region
        %s142 = ssub.s32 %s9, 1
        %p143 = pneg %p30
        %p144 = pneg %p27
        %p145 = scmp.lt.s32.totalorder %s14, 1
        %s146 = scalar_select %p145, %s14, 1
        %s147 = smul.addr %s146, 3
        %s148 = smul.addr %s147, 4
        %s149 = scalar_lea.vmem %s1, %s148
        %p150 = pneg %p56
        %p151 = pneg %p53
        %p152 = pneg %p77
        %p153 = pneg %p74
        %p154 = pneg %p103
        %p155 = pneg %p100
        %s156 = sand.u32 %s90, 1
        %s157 = sand.u32 %s90, 1
        %s158 = smul.addr %s157, 64
        %s159 = scalar_lea.vmem [#allocation2], %s158
        %p160 = scmp.lt.s32.totalorder %s14, 1
        %s161 = scalar_select %p160, %s14, 1
        %s162 = smul.addr %s161, 3
        %s163 = smul.addr %s162, 4
        %s164 = scalar_lea.vmem %s1, %s163
        %v165 = vld [vmem:[%s164] sm:$0xff]
        %v166 = vld [vmem:[%s164 + $0x8] sm:$0xf]
        %v167 = vld [vmem:[%s0] sm:$0xff]
        %v168 = vld [vmem:[%s0 + $0x8] sm:$0xff]
        %v169 = vld [vmem:[%s0 + $0x10] sm:$0xff]
        %v170 = vld [vmem:[%s0 + $0x18] sm:$0xff]
        %v171 = vld [vmem:[%s0 + $0x20] sm:$0xff]
        %v172 = vld [vmem:[%s0 + $0x28] sm:$0xff]
        %v173 = vld [vmem:[%s0 + $0x30] sm:$0xff]
        %v174 = vld [vmem:[%s0 + $0x38] sm:$0xff]
        %v175 = vld [vmem:[%s0 + $0x40] sm:$0xff]
        %178 = vst [vmem:[#allocation1] ss:$2 sm:$0xff] %v165
        %s179 = scalar_lea.vmem [#allocation1], 16
        %180 = vst [vmem:[%s179] ss:$2 sm:$0xff] %v166
        %v181 = vld.sshfl [vmem:[#allocation1] sm:$0xff pattern:$0x75316420]
        %v182 = vld.sshfl [vmem:[#allocation1 + $0x8] sm:$0xff pattern:$0x75316420]
        %v183 = vld.sshfl [vmem:[#allocation1 + $0x10] sm:$0xff pattern:$0x75316420]
        %vm184 = vcmask 31744
        %v186 = vsel %vm184, %v167, 0
        %v189 = vsel %vm184, %v168, 0
        %v192 = vsel %vm184, %v169, 0
        %v195 = vsel %vm184, %v170, 0
        %v198 = vsel %vm184, %v171, 0
        %v201 = vsel %vm184, %v172, 0
        %v204 = vsel %vm184, %v173, 0
        %v207 = vsel %vm184, %v174, 0
        %v210 = vsel %vm184, %v175, 0
        %vm212 = vcmask 1043456
        %v213 = vsel %vm212, %v181, 0
        %v215 = vsel %vm212, %v182, 0
        %v217 = vsel %vm212, %v183, 0
        %219 = vmatpush.msra.mxu0 0.0
        %220 = vmatpush.msra.mxu0 0.0
        %221 = vmatpush.msra.mxu0 0.0
        %222 = vmatpush.msra.mxu0 0.0
        %223 = vmatpush.msra.mxu0 0.0
        %224 = vmatpush.msra.mxu0 0.0
        %225 = vmatpush.msra.mxu0 0.0
        %226 = vmatpush.msra.mxu0 0.0
        %227 = vmatpush.msra.mxu0 0.0
        %228 = vmatpush.msra.mxu0 0.0
        %229 = vmatpush.msra.mxu0 0.0
        %230 = vmatpush.msra.mxu0 0.0
        %231 = vmatpush.msra.mxu0 0.0
        %232 = vmatpush.msra.mxu0 0.0
        %233 = vmatpush.msra.mxu0 0.0
        %234 = vmatpush.msra.mxu0 %v213
        %235 = vmatmul.f32.gmra.mxu0 %v186
        %v236 = vpop.f32.mrf.mxu0
        %v237 = vadd.f32 0.0, %v236
        %238 = vmatmul.f32.gmra.mxu0 %v189
        %v239 = vpop.f32.mrf.mxu0
        %v240 = vadd.f32 0.0, %v239
        %241 = vmatmul.f32.gmra.mxu0 %v192
        %v242 = vpop.f32.mrf.mxu0
        %v243 = vadd.f32 0.0, %v242
        %244 = vmatmul.f32.gmra.mxu0 %v195
        %v245 = vpop.f32.mrf.mxu0
        %v246 = vadd.f32 0.0, %v245
        %247 = vmatmul.f32.gmra.mxu0 %v198
        %v248 = vpop.f32.mrf.mxu0
        %v249 = vadd.f32 0.0, %v248
        %250 = vmatmul.f32.gmra.mxu0 %v201
        %v251 = vpop.f32.mrf.mxu0
        %v252 = vadd.f32 0.0, %v251
        %253 = vmatmul.f32.gmra.mxu0 %v204
        %v254 = vpop.f32.mrf.mxu0
        %v255 = vadd.f32 0.0, %v254
        %256 = vmatmul.f32.gmra.mxu0 %v207
        %v257 = vpop.f32.mrf.mxu0
        %v258 = vadd.f32 0.0, %v257
        %259 = vmatmul.f32.gmra.mxu0 %v210
        %v260 = vpop.f32.mrf.mxu0
        %v261 = vadd.f32 0.0, %v260
        %262 = vdwg.mxu0
        %263 = vmatpush.msra.mxu0 0.0
        %264 = vmatpush.msra.mxu0 0.0
        %265 = vmatpush.msra.mxu0 0.0
        %266 = vmatpush.msra.mxu0 0.0
        %267 = vmatpush.msra.mxu0 0.0
        %268 = vmatpush.msra.mxu0 0.0
        %269 = vmatpush.msra.mxu0 0.0
        %270 = vmatpush.msra.mxu0 0.0
        %271 = vmatpush.msra.mxu0 0.0
        %272 = vmatpush.msra.mxu0 0.0
        %273 = vmatpush.msra.mxu0 0.0
        %274 = vmatpush.msra.mxu0 0.0
        %275 = vmatpush.msra.mxu0 0.0
        %276 = vmatpush.msra.mxu0 0.0
        %277 = vmatpush.msra.mxu0 0.0
        %278 = vmatpush.msra.mxu0 %v215
        %279 = vmatmul.f32.gmra.mxu0 %v186
        %v280 = vpop.f32.mrf.mxu0
        %v281 = vadd.f32 0.0, %v280
        %282 = vmatmul.f32.gmra.mxu0 %v189
        %v283 = vpop.f32.mrf.mxu0
        %v284 = vadd.f32 0.0, %v283
        %285 = vmatmul.f32.gmra.mxu0 %v192
        %v286 = vpop.f32.mrf.mxu0
        %v287 = vadd.f32 0.0, %v286
        %288 = vmatmul.f32.gmra.mxu0 %v195
        %v289 = vpop.f32.mrf.mxu0
        %v290 = vadd.f32 0.0, %v289
        %291 = vmatmul.f32.gmra.mxu0 %v198
        %v292 = vpop.f32.mrf.mxu0
        %v293 = vadd.f32 0.0, %v292
        %294 = vmatmul.f32.gmra.mxu0 %v201
        %v295 = vpop.f32.mrf.mxu0
        %v296 = vadd.f32 0.0, %v295
        %297 = vmatmul.f32.gmra.mxu0 %v204
        %v298 = vpop.f32.mrf.mxu0
        %v299 = vadd.f32 0.0, %v298
        %300 = vmatmul.f32.gmra.mxu0 %v207
        %v301 = vpop.f32.mrf.mxu0
        %v302 = vadd.f32 0.0, %v301
        %303 = vmatmul.f32.gmra.mxu0 %v210
        %v304 = vpop.f32.mrf.mxu0
        %v305 = vadd.f32 0.0, %v304
        %306 = vdwg.mxu0
        %307 = vmatpush.msra.mxu0 0.0
        %308 = vmatpush.msra.mxu0 0.0
        %309 = vmatpush.msra.mxu0 0.0
        %310 = vmatpush.msra.mxu0 0.0
        %311 = vmatpush.msra.mxu0 0.0
        %312 = vmatpush.msra.mxu0 0.0
        %313 = vmatpush.msra.mxu0 0.0
        %314 = vmatpush.msra.mxu0 0.0
        %315 = vmatpush.msra.mxu0 0.0
        %316 = vmatpush.msra.mxu0 0.0
        %317 = vmatpush.msra.mxu0 0.0
        %318 = vmatpush.msra.mxu0 0.0
        %319 = vmatpush.msra.mxu0 0.0
        %320 = vmatpush.msra.mxu0 0.0
        %321 = vmatpush.msra.mxu0 0.0
        %322 = vmatpush.msra.mxu0 %v217
        %323 = vmatmul.f32.gmra.mxu0 %v186
        %v324 = vpop.f32.mrf.mxu0
        %v325 = vadd.f32 0.0, %v324
        %326 = vmatmul.f32.gmra.mxu0 %v189
        %v327 = vpop.f32.mrf.mxu0
        %v328 = vadd.f32 0.0, %v327
        %329 = vmatmul.f32.gmra.mxu0 %v192
        %v330 = vpop.f32.mrf.mxu0
        %v331 = vadd.f32 0.0, %v330
        %332 = vmatmul.f32.gmra.mxu0 %v195
        %v333 = vpop.f32.mrf.mxu0
        %v334 = vadd.f32 0.0, %v333
        %335 = vmatmul.f32.gmra.mxu0 %v198
        %v336 = vpop.f32.mrf.mxu0
        %337 = vmatmul.f32.gmra.mxu0 %v201
        %v338 = vpop.f32.mrf.mxu0
        %339 = vmatmul.f32.gmra.mxu0 %v204
        %v340 = vpop.f32.mrf.mxu0
        %v341 = vadd.f32 0.0, %v340
        %342 = vmatmul.f32.gmra.mxu0 %v207
        %v343 = vpop.f32.mrf.mxu0
        %344 = vmatmul.f32.gmra.mxu0 %v210
        %v345 = vpop.f32.mrf.mxu0
        %346 = vdwg.mxu0
        %350 = vrot.lane.b32.xlu0 %v246, 127
        %v351 = vpop.permute.xlu0 %350
        %352 = vrot.lane.b32.xlu0 %v290, 127
        %v353 = vpop.permute.xlu0 %352
        %354 = vrot.lane.b32.xlu0 %v334, 127
        %v355 = vpop.permute.xlu0 %354
        %vm356 = vcmask 1039360
        %v357 = vsel %vm356, %v351, %v353
        %v358 = vsel %vm356, %v353, %v355
        %v361 = vadd.f32 %v252, %v357
        %v362 = vadd.f32 %v296, %v358
        %366 = vrot.lane.b32.xlu0 %v240, 112
        %v367 = vpop.permute.xlu0 %366
        %368 = vrot.lane.b32.xlu0 %v284, 112
        %v369 = vpop.permute.xlu0 %368
        %370 = vrot.lane.b32.xlu0 %v328, 112
        %v371 = vpop.permute.xlu0 %370
        %vm372 = vcmask 916480
        %v373 = vsel %vm372, %v367, %v369
        %v374 = vsel %vm372, %v369, %v371
        %v377 = vadd.f32 %v258, %v373
        %v378 = vadd.f32 %v302, %v374
        %382 = vrot.lane.b32.xlu0 %v255, 127
        %v383 = vpop.permute.xlu0 %382
        %384 = vrot.lane.b32.xlu0 %v299, 127
        %v385 = vpop.permute.xlu0 %384
        %386 = vrot.lane.b32.xlu0 %v341, 127
        %v387 = vpop.permute.xlu0 %386
        %v388 = vsel %vm356, %v383, %v385
        %v389 = vsel %vm356, %v385, %v387
        %v392 = vadd.f32 %v261, %v388
        %v393 = vadd.f32 %v305, %v389
        %397 = vrot.lane.b32.xlu0 %v243, 112
        %v398 = vpop.permute.xlu0 %397
        %399 = vrot.lane.b32.xlu0 %v287, 112
        %v400 = vpop.permute.xlu0 %399
        %401 = vrot.lane.b32.xlu0 %v331, 112
        %v402 = vpop.permute.xlu0 %401
        %v403 = vsel %vm372, %v398, %v400
        %v404 = vsel %vm372, %v400, %v402
        %v407 = vadd.f32 %v392, %v403
        %v408 = vadd.f32 %v393, %v404
        %412 = vrot.lane.b32.xlu0 %v237, 111
        %v413 = vpop.permute.xlu0 %412
        %414 = vrot.lane.b32.xlu0 %v281, 111
        %v415 = vpop.permute.xlu0 %414
        %416 = vrot.lane.b32.xlu0 %v325, 111
        %v417 = vpop.permute.xlu0 %416
        %vm418 = vcmask 908288
        %v419 = vsel %vm418, %v413, %v415
        %v420 = vsel %vm418, %v415, %v417
        %v423 = vadd.f32 %v407, %v419
        %v424 = vadd.f32 %v408, %v420
        %v425 = vld [vmem:[%s2] sm:$0xff]
        %427 = vset.pattern.permute.xlu0 0
        %428 = vperm.xlu0 %427, %v425
        %v429 = vpop.permute.xlu0 %428
        %v431 = vadd.f32 %v249, %v429
        %v432 = vadd.f32 %v293, %v429
        %433 = vst [vmem:[%s159] sm:$0xff] %v431
        %434 = vst [vmem:[%s159 + $0x8] sm:$0xff] %v432
        %v435 = vadd.f32 %v361, %v429
        %v436 = vadd.f32 %v362, %v429
        %s437 = scalar_lea.vmem %s159, 16 [#allocation2]
        %438 = vst [vmem:[%s437] sm:$0xff] %v435
        %439 = vst [vmem:[%s437 + $0x8] sm:$0xff] %v436
        %v440 = vadd.f32 %v377, %v429
        %v441 = vadd.f32 %v378, %v429
        %s442 = scalar_lea.vmem %s159, 32 [#allocation2]
        %443 = vst [vmem:[%s442] sm:$0xff] %v440
        %444 = vst [vmem:[%s442 + $0x8] sm:$0xff] %v441
        %v445 = vadd.f32 %v423, %v429
        %v446 = vadd.f32 %v424, %v429
        %s447 = scalar_lea.vmem %s159, 48 [#allocation2]
        %448 = vst [vmem:[%s447] sm:$0xff] %v445
        %449 = vst [vmem:[%s447 + $0x8] sm:$0xff] %v446
        %s450 = sand.u32 %s90, 1
        %s451 = sand.u32 %s90, 1
        %s452 = smul.addr %s451, 64
        %s453 = scalar_lea.vmem [#allocation2], %s452
        // Predicated region
        $region33: #{upscale_conv_transpose2d.1} parent=31 // pred_check
          %p454 = pneg %p100
        $region34: #{upscale_conv_transpose2d.1} parent=31 // pred_check_branch
          %456 = sbr.rel (%p454) target = $region36
        $region35: #{upscale_conv_transpose2d.1} parent=31 // pred_region
          %s457 = smul.addr %s14, 2
          %s458 = smul.addr %s457, 8
          %s459 = scalar_lea.vmem %s3, %s458
          // Predicated region
          $region37: #{upscale_conv_transpose2d.1} parent=35 // pred_check
            _
          $region38: #{upscale_conv_transpose2d.1} parent=35 // pred_check_branch
            %461 = sbr.rel (0) target = $region40
          $region39: #{upscale_conv_transpose2d.1} parent=35 // pred_region
            // Predicated region
            $region41: #{upscale_conv_transpose2d.1} parent=39 // pred_check
              _
            $region42: #{upscale_conv_transpose2d.1} parent=39 // pred_check_branch
              %463 = sbr.rel (0) target = $region44
            $region43: #{upscale_conv_transpose2d.1} parent=39 // pred_region
              loop: start=0, step=1, limit=1
              $region45: #{upscale_conv_transpose2d.1} parent=43 // loop_pre_header
                _
              $region46: #{upscale_conv_transpose2d.1} parent=43 // loop_header
                %s465 = sphi 0, %s469
                %p466 = scmp.ge.s32.totalorder %s465, 1
                %s470 = sphi %s453, %s453
                %s471 = sphi %s459, %s459
              $region47: #{upscale_conv_transpose2d.1} parent=43 // loop_header_branch
                %468 = sbr.rel (%p466) target = $region51
              $region48: #{upscale_conv_transpose2d.1} parent=43 // loop_body
                %v472 = vld [vmem:[%s470] sm:$0xff]
                %473 = vst [vmem:[%s471] sm:$0xff] %v472
                %v474 = vld [vmem:[%s470 + $0x8] sm:$0xff]
                %475 = vst [vmem:[%s471 + $0x8] sm:$0xff] %v474
                %v476 = vld [vmem:[%s470 + $0x10] sm:$0xff]
                %477 = vst [vmem:[%s471 + $0x20] sm:$0xff] %v476
                %v478 = vld [vmem:[%s470 + $0x18] sm:$0xff]
                %479 = vst [vmem:[%s471 + $0x28] sm:$0xff] %v478
                %v480 = vld [vmem:[%s470 + $0x20] sm:$0xff]
                %481 = vst [vmem:[%s471 + $0x40] sm:$0xff] %v480
                %v482 = vld [vmem:[%s470 + $0x28] sm:$0xff]
                %483 = vst [vmem:[%s471 + $0x48] sm:$0xff] %v482
                %v484 = vld [vmem:[%s470 + $0x30] sm:$0xff]
                %485 = vst [vmem:[%s471 + $0x60] sm:$0xff] %v484
                %v486 = vld [vmem:[%s470 + $0x38] sm:$0xff]
                %487 = vst [vmem:[%s471 + $0x68] sm:$0xff] %v486
              $region49: #{upscale_conv_transpose2d.1} parent=43 // loop_footer
                %s469 = sadd.s32 1, %s465
              $region50: #{upscale_conv_transpose2d.1} parent=43 // loop_footer_branch
                %464 = sbr.rel target = $region46
              $region51: #{upscale_conv_transpose2d.1} parent=43 // loop_exit
                _
            $region44: #{upscale_conv_transpose2d.1} parent=39 // pred_fallthru
              _
            // Predicated region
            $region52: #{upscale_conv_transpose2d.1} parent=39 // pred_check
              _
            $region53: #{upscale_conv_transpose2d.1} parent=39 // pred_check_branch
              %489 = sbr.rel target = $region55
            $region54: #{upscale_conv_transpose2d.1} parent=39 // pred_region
              _
            $region55: #{upscale_conv_transpose2d.1} parent=39 // pred_fallthru
              _
          $region40: #{upscale_conv_transpose2d.1} parent=35 // pred_fallthru
            _
          %490 = vnop
        $region36: #{upscale_conv_transpose2d.1} parent=31 // pred_fallthru
          _
      $region32: #{upscale_conv_transpose2d.1} parent=5 // pred_fallthru
        _
      %p491 = scmp.le.s32.totalorder 2, %s9
      // Predicated region
      $region56: #{upscale_conv_transpose2d.1} parent=5 // pred_check
        %p492 = pneg %p491
      $region57: #{upscale_conv_transpose2d.1} parent=5 // pred_check_branch
        %494 = sbr.rel (%p492) target = $region59
      $region58: #{upscale_conv_transpose2d.1} parent=5 // pred_region
        %s495 = ssub.s32 %s9, 2
        // Predicated region
        $region60: #{upscale_conv_transpose2d.1} parent=58 // pred_check
          %p496 = pneg %p106
        $region61: #{upscale_conv_transpose2d.1} parent=58 // pred_check_branch
          %498 = sbr.rel (%p496) target = $region63
        $region62: #{upscale_conv_transpose2d.1} parent=58 // pred_region
          %s499 = sand.u32 %s91, 1
          %s500 = sand.u32 %s91, 1
          %s501 = smul.addr %s500, 64
          %s502 = scalar_lea.vmem [#allocation2], %s501
        $region63: #{upscale_conv_transpose2d.1} parent=58 // pred_fallthru
          _
      $region59: #{upscale_conv_transpose2d.1} parent=5 // pred_fallthru
        _
    $region6: #{upscale_conv_transpose2d.1} parent=1 // loop_footer
      %s13 = sadd.s32 1, %s9
    $region7: #{upscale_conv_transpose2d.1} parent=1 // loop_footer_branch
      %8 = sbr.rel target = $region3
    $region8: #{upscale_conv_transpose2d.1} parent=1 // loop_exit
      _

</llo_original>
